<compile_context>
chip_gen: v7x
topology: tpu7x:2x2x1
jax: 0.10.0
libtpu: 0.0.40
codegen_flags: <defaults>
</compile_context>

<pallas_src>
import functools

import jax
import jax.numpy as jnp
import numpy as np
from jax.experimental import pallas as pl
from jax.experimental.pallas import tpu as pltpu


# ----------------------------------------------------------------------------
# On-device bounded histogram (per-value counts) kernel.
# ----------------------------------------------------------------------------
def _round_up(a: int, m: int) -> int:
    return (a + m - 1) // m * m


def _make_value_counts_kernel(values, dtype, total, block_rows, lanes):
    n_vals = len(values)

    def kernel(x_ref, counts_ref):
        i = pl.program_id(0)

        @pl.when(i == 0)
        def _init():
            for j in range(n_vals):
                counts_ref[j] = jnp.int32(0)

        x = x_ref[...]  # (block_rows, lanes) tile
        # Mask out (a) the zero padding added when flattening to lanes of 128
        # and (b) the undefined tail of the ragged last grid block.
        row = jax.lax.broadcasted_iota(jnp.int32, x.shape, 0)
        col = jax.lax.broadcasted_iota(jnp.int32, x.shape, 1)
        flat = (i * block_rows + row) * lanes + col
        valid = flat < total

        for j, v in enumerate(values):
            hit = jnp.logical_and(x == jnp.asarray(v, dtype), valid)
            counts_ref[j] = counts_ref[j] + jnp.sum(hit.astype(jnp.int32))

    return kernel


def _device_value_counts(x: jnp.ndarray, values) -> jnp.ndarray:
    """Counts of each value in `values` (static tuple) over all of x.

    Returns an int32 vector of shape (len(values),).  The full tensor is
    streamed through VMEM in ~2 MiB lane-dense blocks; only the tiny counts
    vector leaves the device.
    """
    values = tuple(values)
    n_vals = len(values)
    lanes = 128
    itemsize = jnp.dtype(x.dtype).itemsize
    # dtype-aware sublane multiple: f32 -> 8, bf16 -> 16, int8/fp8 -> 32
    sub = {4: 8, 2: 16, 1: 32}.get(itemsize, 8)

    total = x.size
    flat = x.reshape(-1)
    rows = pl.cdiv(total, lanes)
    padded = rows * lanes
    if padded != total:
        # Pad to full 128-lane rows; padded elements are masked in-kernel.
        flat = jnp.pad(flat, (0, padded - total))
    x2d = flat.reshape(rows, lanes)

    # Fixed ~2 MiB blocks: large enough to amortize the ~0.35us per-step
    # overhead, small enough that the double-buffered input (~4 MiB) fits the
    # default scoped-VMEM limit on v5e/v6e/v7x.
    target_bytes = 2 * 1024 * 1024
    block_rows = max(sub, (target_bytes // (lanes * itemsize)) // sub * sub)
    block_rows = min(block_rows, _round_up(rows, sub))
    grid = (pl.cdiv(rows, block_rows),)

    kernel = _make_value_counts_kernel(values, x.dtype, total, block_rows, lanes)
    return pl.pallas_call(
        kernel,
        out_shape=jax.ShapeDtypeStruct((n_vals,), jnp.int32),
        grid=grid,
        in_specs=[pl.BlockSpec((block_rows, lanes), lambda i: (i, 0))],
        # Tiny counts accumulator lives in SMEM, resident across the grid.
        out_specs=pl.BlockSpec(memory_space=pltpu.MemorySpace.SMEM),
        compiler_params=pltpu.CompilerParams(
            dimension_semantics=("arbitrary",),  # reduction axis
        ),
    )(x2d)


# ----------------------------------------------------------------------------
# Optional debug identity copy: one HBM->HBM DMA, no VMEM staging.
# ----------------------------------------------------------------------------
def _hbm_copy_kernel(x_hbm, o_hbm, sem):
    cp = pltpu.make_async_copy(x_hbm, o_hbm, sem)
    cp.start()
    cp.wait()


def _device_identity_copy(x: jnp.ndarray) -> jnp.ndarray:
    return pl.pallas_call(
        _hbm_copy_kernel,
        out_shape=jax.ShapeDtypeStruct(x.shape, x.dtype),
        in_specs=[pl.BlockSpec(memory_space=pl.ANY)],
        out_specs=pl.BlockSpec(memory_space=pl.ANY),
        scratch_shapes=[pltpu.SemaphoreType.DMA],
    )(x)


# ----------------------------------------------------------------------------
# Host-side printing helpers (async, once per forward call).
# ----------------------------------------------------------------------------
def _print_value_counts_host(values_np, counts):
    counts = np.asarray(counts)
    present = counts > 0
    print("unique latent values:", (values_np[present], counts[present]))


def _print_unique_full_host(x_host):
    vals, cnts = np.unique(np.asarray(x_host), return_counts=True)
    print("unique latent values:", (vals, cnts))


# ----------------------------------------------------------------------------
# PrintLayer.forward equivalent.
# ----------------------------------------------------------------------------
def print_layer(x: jnp.ndarray, known_values=None, use_device_copy: bool = False):
    """Pallas equivalent of PrintLayer.forward.

    Side effect: asynchronously prints unique latent values and their counts.
    Returns x unchanged.  The return path is free on device (no copy); a
    device copy (single HBM->HBM DMA) is only made when `use_device_copy`
    is set for debugging.

    If `known_values` (a static tuple of the possible latent values) is
    given, counts are reduced on device with a Pallas kernel and only a few
    bytes are shipped to the host.
    """
    if known_values is not None:
        values = tuple(known_values)
        counts = _device_value_counts(x, values)
        jax.debug.callback(
            functools.partial(_print_value_counts_host, np.asarray(values)),
            counts,
        )
    else:
        # TODO(synk): torch.unique(return_counts=True) has a data-dependent
        # output shape, so the general case computes it in an async host
        # callback (ships the full tensor over PCIe).
        jax.debug.callback(_print_unique_full_host, x)

    if use_device_copy:
        return _device_identity_copy(x)
    return x  # identity: free on device


if __name__ == "__main__":
    key = jax.random.PRNGKey(0)
    # Small, discrete "latent" values so unique/counts are meaningful.
    x = jax.random.randint(key, (2, 4, 16, 16), minval=0, maxval=5).astype(
        jnp.float32
    )
    values = (0.0, 1.0, 2.0, 3.0, 4.0)

    fwd = jax.jit(functools.partial(print_layer, known_values=values))
    y = fwd(x)
    jax.block_until_ready(y)
    jax.effects_barrier()  # flush the async unique/count print

    # Identity semantics.
    assert y.shape == x.shape and y.dtype == x.dtype
    assert bool(jnp.all(y == x))

    # Verify the on-device histogram kernel against numpy's unique.
    counts = jax.block_until_ready(
        jax.jit(functools.partial(_device_value_counts, values=values))(x)
    )
    ref_vals, ref_cnts = np.unique(np.asarray(x), return_counts=True)
    ref = {float(v): int(c) for v, c in zip(ref_vals, ref_cnts)}
    expected = np.array([ref.get(float(v), 0) for v in values], dtype=np.int32)
    np.testing.assert_array_equal(np.asarray(counts), expected)

    # Exercise the optional debug HBM->HBM DMA identity copy once.
    y2 = jax.block_until_ready(jax.jit(_device_identity_copy)(x))
    assert bool(jnp.all(y2 == x))

    print("KERNEL_OK")
</pallas_src>

<mosaic_0001>
module attributes {stable_mosaic.version = 11 : i64} {
  func.func @kernel(%arg0: i32, %arg1: memref<16x128xf32, #tpu.memory_space<vmem>>, %arg2: memref<5xi32, #tpu.memory_space<smem>>) attributes {dimension_semantics = [#tpu.dimension_semantics<arbitrary>], iteration_bounds = array<i64: 1>, scalar_prefetch = 0 : i64, scratch_operands = 0 : i64, tpu.core_type = #tpu.core_type<tc>, window_params = [{transform_indices = @transform_0, window_bounds = array<i64: 16, 128>}, {transform_indices = @transform_1, window_bounds = array<i64: 5>}]} {
    %c0_i32 = arith.constant 0 : i32
    %0 = arith.cmpi eq, %arg0, %c0_i32 : i32
    %1 = arith.extui %0 : i1 to i32
    %c0_i32_0 = arith.constant 0 : i32
    %2 = arith.cmpi ne, %1, %c0_i32_0 : i32
    scf.if %2 {
      %c0_i32_17 = arith.constant 0 : i32
      %c0_18 = arith.constant 0 : index
      %69 = memref.load %arg2[%c0_18] : memref<5xi32, #tpu.memory_space<smem>>
      memref.store %c0_i32_17, %arg2[%c0_18] : memref<5xi32, #tpu.memory_space<smem>>
      %c0_i32_19 = arith.constant 0 : i32
      %c1_20 = arith.constant 1 : index
      %70 = memref.load %arg2[%c1_20] : memref<5xi32, #tpu.memory_space<smem>>
      memref.store %c0_i32_19, %arg2[%c1_20] : memref<5xi32, #tpu.memory_space<smem>>
      %c0_i32_21 = arith.constant 0 : i32
      %c2_22 = arith.constant 2 : index
      %71 = memref.load %arg2[%c2_22] : memref<5xi32, #tpu.memory_space<smem>>
      memref.store %c0_i32_21, %arg2[%c2_22] : memref<5xi32, #tpu.memory_space<smem>>
      %c0_i32_23 = arith.constant 0 : i32
      %c3_24 = arith.constant 3 : index
      %72 = memref.load %arg2[%c3_24] : memref<5xi32, #tpu.memory_space<smem>>
      memref.store %c0_i32_23, %arg2[%c3_24] : memref<5xi32, #tpu.memory_space<smem>>
      %c0_i32_25 = arith.constant 0 : i32
      %c4_26 = arith.constant 4 : index
      %73 = memref.load %arg2[%c4_26] : memref<5xi32, #tpu.memory_space<smem>>
      memref.store %c0_i32_25, %arg2[%c4_26] : memref<5xi32, #tpu.memory_space<smem>>
    } else {
    }
    %c0 = arith.constant 0 : index
    %c0_1 = arith.constant 0 : index
    %3 = vector.load %arg1[%c0, %c0_1] : memref<16x128xf32, #tpu.memory_space<vmem>>, vector<16x128xf32>
    %4 = tpu.iota {dimensions = array<i32: 0>} : vector<16x128xi32>
    %5 = tpu.iota {dimensions = array<i32: 1>} : vector<16x128xi32>
    %c16_i32 = arith.constant 16 : i32
    %6 = arith.muli %arg0, %c16_i32 : i32
    %7 = vector.broadcast %6 : i32 to vector<16x128xi32>
    %8 = arith.addi %7, %4 : vector<16x128xi32>
    %c128_i32 = arith.constant 128 : i32
    %9 = vector.broadcast %c128_i32 : i32 to vector<16x128xi32>
    %10 = arith.muli %8, %9 : vector<16x128xi32>
    %11 = arith.addi %10, %5 : vector<16x128xi32>
    %c2048_i32 = arith.constant 2048 : i32
    %12 = vector.broadcast %c2048_i32 : i32 to vector<16x128xi32>
    %13 = arith.cmpi slt, %11, %12 : vector<16x128xi32>
    %cst = arith.constant 0.000000e+00 : f32
    %14 = vector.broadcast %cst : f32 to vector<16x128xf32>
    %15 = arith.cmpf oeq, %3, %14 : vector<16x128xf32>
    %16 = arith.andi %15, %13 : vector<16x128xi1>
    %c0_2 = arith.constant 0 : index
    %17 = memref.load %arg2[%c0_2] : memref<5xi32, #tpu.memory_space<smem>>
    %18 = arith.extui %16 : vector<16x128xi1> to vector<16x128xi32>
    %19 = vector.shape_cast %18 : vector<16x128xi32> to vector<1x16x128xi32>
    %cst_3 = arith.constant dense<0> : vector<1xi32>
    %20 = vector.multi_reduction <add>, %19, %cst_3 [1, 2] : vector<1x16x128xi32> to vector<1xi32>
    %21 = vector.shape_cast %20 : vector<1xi32> to vector<1x1x1xi32>
    %22 = vector.extract %21[0, 0, 0] : i32 from vector<1x1x1xi32>
    %23 = arith.addi %17, %22 : i32
    %c0_4 = arith.constant 0 : index
    %24 = memref.load %arg2[%c0_4] : memref<5xi32, #tpu.memory_space<smem>>
    memref.store %23, %arg2[%c0_4] : memref<5xi32, #tpu.memory_space<smem>>
    %cst_5 = arith.constant 1.000000e+00 : f32
    %25 = vector.broadcast %cst_5 : f32 to vector<16x128xf32>
    %26 = arith.cmpf oeq, %3, %25 : vector<16x128xf32>
    %27 = arith.andi %26, %13 : vector<16x128xi1>
    %c1 = arith.constant 1 : index
    %28 = memref.load %arg2[%c1] : memref<5xi32, #tpu.memory_space<smem>>
    %29 = arith.extui %27 : vector<16x128xi1> to vector<16x128xi32>
    %30 = vector.shape_cast %29 : vector<16x128xi32> to vector<1x16x128xi32>
    %cst_6 = arith.constant dense<0> : vector<1xi32>
    %31 = vector.multi_reduction <add>, %30, %cst_6 [1, 2] : vector<1x16x128xi32> to vector<1xi32>
    %32 = vector.shape_cast %31 : vector<1xi32> to vector<1x1x1xi32>
    %33 = vector.extract %32[0, 0, 0] : i32 from vector<1x1x1xi32>
    %34 = arith.addi %28, %33 : i32
    %c1_7 = arith.constant 1 : index
    %35 = memref.load %arg2[%c1_7] : memref<5xi32, #tpu.memory_space<smem>>
    memref.store %34, %arg2[%c1_7] : memref<5xi32, #tpu.memory_space<smem>>
    %cst_8 = arith.constant 2.000000e+00 : f32
    %36 = vector.broadcast %cst_8 : f32 to vector<16x128xf32>
    %37 = arith.cmpf oeq, %3, %36 : vector<16x128xf32>
    %38 = arith.andi %37, %13 : vector<16x128xi1>
    %c2 = arith.constant 2 : index
    %39 = memref.load %arg2[%c2] : memref<5xi32, #tpu.memory_space<smem>>
    %40 = arith.extui %38 : vector<16x128xi1> to vector<16x128xi32>
    %41 = vector.shape_cast %40 : vector<16x128xi32> to vector<1x16x128xi32>
    %cst_9 = arith.constant dense<0> : vector<1xi32>
    %42 = vector.multi_reduction <add>, %41, %cst_9 [1, 2] : vector<1x16x128xi32> to vector<1xi32>
    %43 = vector.shape_cast %42 : vector<1xi32> to vector<1x1x1xi32>
    %44 = vector.extract %43[0, 0, 0] : i32 from vector<1x1x1xi32>
    %45 = arith.addi %39, %44 : i32
    %c2_10 = arith.constant 2 : index
    %46 = memref.load %arg2[%c2_10] : memref<5xi32, #tpu.memory_space<smem>>
    memref.store %45, %arg2[%c2_10] : memref<5xi32, #tpu.memory_space<smem>>
    %cst_11 = arith.constant 3.000000e+00 : f32
    %47 = vector.broadcast %cst_11 : f32 to vector<16x128xf32>
    %48 = arith.cmpf oeq, %3, %47 : vector<16x128xf32>
    %49 = arith.andi %48, %13 : vector<16x128xi1>
    %c3 = arith.constant 3 : index
    %50 = memref.load %arg2[%c3] : memref<5xi32, #tpu.memory_space<smem>>
    %51 = arith.extui %49 : vector<16x128xi1> to vector<16x128xi32>
    %52 = vector.shape_cast %51 : vector<16x128xi32> to vector<1x16x128xi32>
    %cst_12 = arith.constant dense<0> : vector<1xi32>
    %53 = vector.multi_reduction <add>, %52, %cst_12 [1, 2] : vector<1x16x128xi32> to vector<1xi32>
    %54 = vector.shape_cast %53 : vector<1xi32> to vector<1x1x1xi32>
    %55 = vector.extract %54[0, 0, 0] : i32 from vector<1x1x1xi32>
    %56 = arith.addi %50, %55 : i32
    %c3_13 = arith.constant 3 : index
    %57 = memref.load %arg2[%c3_13] : memref<5xi32, #tpu.memory_space<smem>>
    memref.store %56, %arg2[%c3_13] : memref<5xi32, #tpu.memory_space<smem>>
    %cst_14 = arith.constant 4.000000e+00 : f32
    %58 = vector.broadcast %cst_14 : f32 to vector<16x128xf32>
    %59 = arith.cmpf oeq, %3, %58 : vector<16x128xf32>
    %60 = arith.andi %59, %13 : vector<16x128xi1>
    %c4 = arith.constant 4 : index
    %61 = memref.load %arg2[%c4] : memref<5xi32, #tpu.memory_space<smem>>
    %62 = arith.extui %60 : vector<16x128xi1> to vector<16x128xi32>
    %63 = vector.shape_cast %62 : vector<16x128xi32> to vector<1x16x128xi32>
    %cst_15 = arith.constant dense<0> : vector<1xi32>
    %64 = vector.multi_reduction <add>, %63, %cst_15 [1, 2] : vector<1x16x128xi32> to vector<1xi32>
    %65 = vector.shape_cast %64 : vector<1xi32> to vector<1x1x1xi32>
    %66 = vector.extract %65[0, 0, 0] : i32 from vector<1x1x1xi32>
    %67 = arith.addi %61, %66 : i32
    %c4_16 = arith.constant 4 : index
    %68 = memref.load %arg2[%c4_16] : memref<5xi32, #tpu.memory_space<smem>>
    memref.store %67, %arg2[%c4_16] : memref<5xi32, #tpu.memory_space<smem>>
    return
  }
  func.func @transform_0(%arg0: i32) -> (i32, i32) {
    %c0_i32 = arith.constant 0 : i32
    %c0_i32_0 = arith.constant 0 : i32
    return %arg0, %c0_i32 : i32, i32
  }
  func.func @transform_1(%arg0: i32) -> i32 {
    %c0_i32 = arith.constant 0 : i32
    %c0_i32_0 = arith.constant 0 : i32
    return %c0_i32 : i32
  }
}

</mosaic_0001>

<llo_original>
// kernel: print_layer.1
$region0: #{print_layer.1}
  #allocation0 [shape = 'u32[]', space=smem, size = 0x4, offset = 0x4, fixed_abs, tag = 'smem constant byte address 0x4 - core index']
  #allocation1 [shape = 'u32[144,128]{1,0:T(1,128)}', space=vmem, size = 0x12000, scoped, tag = 'internal scratch']
  %s0 = inlined_call_operand.vmem [shape: f32[16,128], index: 0, kind: input, shape index: {}]
  %s1 = inlined_call_operand.hbm [shape: s32[5], index: 1, kind: output, shape index: {}]
  %s2 = sld [smem:[#allocation0]]
  $region18: #{print_layer.1} parent=0
    _
  %s4 = ssub.s32 1, %s2
  %s5 = scalar_select 0, %s4, %s2
  $region1: #{print_layer.1} parent=0
    #allocation2 [shape = 'u8[512]{0}', space=smem, size = 0x200, scoped, tag = 'output window, operand 0, single buffered']
    #allocation3 [shape = 's32[1]{0}', space=sflag, size = 0x4, scoped, tag = 'scoped memory for print_layer.1']
    %6 = vsyncpa [#allocation3], 0
    // Predicated region
    $region2: #{print_layer.1} parent=1 // pred_check
      _
    $region3: #{print_layer.1} parent=1 // pred_check_branch
      %8 = sbr.rel (0) target = $region5
    $region4: #{print_layer.1} parent=1 // pred_region
      _
    $region5: #{print_layer.1} parent=1 // pred_fallthru
      _
    %p9 = scmp.eq.s32.totalorder 0, 0
    // Predicated region
    $region6: #{print_layer.1} parent=1 // pred_check
      %p10 = pneg %p9
    $region7: #{print_layer.1} parent=1 // pred_check_branch
      %12 = sbr.rel (%p10) target = $region9
    $region8: #{print_layer.1} parent=1 // pred_region
      %s13 = scalar_lea.smem [#allocation2], 0
      %14 = sst [smem:[%s13]] 0
      %s15 = scalar_lea.smem [#allocation2], 1
      %16 = sst [smem:[%s15]] 0
      %s17 = scalar_lea.smem [#allocation2], 2
      %18 = sst [smem:[%s17]] 0
      %s19 = scalar_lea.smem [#allocation2], 3
      %20 = sst [smem:[%s19]] 0
      %s21 = scalar_lea.smem [#allocation2], 4
      %22 = sst [smem:[%s21]] 0
    $region9: #{print_layer.1} parent=1 // pred_fallthru
      _
    %v23 = vld [vmem:[%s0] sm:$0xff]
    %v24 = vld [vmem:[%s0 + $0x8] sm:$0xff]
    %v25 = vlaneseq
    %v26 = vshrl.u32 %v25, 7
    %v27 = vadd.s32 %v26, 8
    %v28 = vlaneseq
    %v29 = vand.u32 %v28, 127
    %s30 = smul.u32 0, 16
    %v31 = vstv %s30
    %v32 = vadd.s32 %v31, %v26
    %v33 = vadd.s32 %v31, %v27
    %v34 = vmul.u32 %v32, 128
    %v35 = vmul.u32 %v33, 128
    %v36 = vadd.s32 %v34, %v29
    %v37 = vadd.s32 %v35, %v29
    %vm38 = vcmp.lt.s32.totalorder %v36, 2048
    %vm39 = vcmp.lt.s32.totalorder %v37, 2048
    %vm40 = vcmp.eq.f32.partialorder %v23, 0.0
    %vm41 = vcmp.eq.f32.partialorder %v24, 0.0
    %vm42 = vmand %vm40, %vm38
    %vm43 = vmand %vm41, %vm39
    %s44 = sld [smem:[#allocation2]]
    %v45 = vsel %vm42, 1, 0
    %v46 = vsel %vm43, 1, 0
    %v47 = vadd.s32 %v45, %v46
    %v48 = vand.u32 %v47, 65535
    %v49 = vshrl.u32 %v47, 16
    %v50 = vcvt.s32.f32 %v48
    %v51 = vcvt.s32.f32 %v49
    %52 = vadd.xlane.f32.xlu0 %v50
    %v53 = vpop.xlane.xlu0 %52
    %54 = vadd.xlane.f32.xlu0 %v51
    %v55 = vpop.xlane.xlu0 %54
    %v56 = vcvt.f32.s32 %v53
    %v57 = vcvt.f32.s32 %v55
    %v58 = vshll.u32 %v57, 16
    %v59 = vadd.s32 %v58, %v56
    %v60 = vrot.slane %v59, 4
    %v61 = vadd.s32 %v59, %v60
    %v62 = vrot.slane %v61, 2
    %v63 = vadd.s32 %v61, %v62
    %v64 = vrot.slane %v63, 1
    %v65 = vadd.s32 %v63, %v64
    %s66 = vtos %v65
    %s67 = sadd.s32 %s44, %s66
    %s68 = scalar_lea.smem [#allocation2], 0
    %69 = sst [smem:[%s68]] %s67
    %vm70 = vcmp.eq.f32.partialorder %v23, 1.0
    %vm71 = vcmp.eq.f32.partialorder %v24, 1.0
    %vm72 = vmand %vm70, %vm38
    %vm73 = vmand %vm71, %vm39
    %s74 = sld [smem:[#allocation2 + $0x1]]
    %v75 = vsel %vm72, 1, 0
    %v76 = vsel %vm73, 1, 0
    %v77 = vadd.s32 %v75, %v76
    %v78 = vand.u32 %v77, 65535
    %v79 = vshrl.u32 %v77, 16
    %v80 = vcvt.s32.f32 %v78
    %v81 = vcvt.s32.f32 %v79
    %82 = vadd.xlane.f32.xlu0 %v80
    %v83 = vpop.xlane.xlu0 %82
    %84 = vadd.xlane.f32.xlu0 %v81
    %v85 = vpop.xlane.xlu0 %84
    %v86 = vcvt.f32.s32 %v83
    %v87 = vcvt.f32.s32 %v85
    %v88 = vshll.u32 %v87, 16
    %v89 = vadd.s32 %v88, %v86
    %v90 = vrot.slane %v89, 4
    %v91 = vadd.s32 %v89, %v90
    %v92 = vrot.slane %v91, 2
    %v93 = vadd.s32 %v91, %v92
    %v94 = vrot.slane %v93, 1
    %v95 = vadd.s32 %v93, %v94
    %s96 = vtos %v95
    %s97 = sadd.s32 %s74, %s96
    %s98 = scalar_lea.smem [#allocation2], 1
    %99 = sst [smem:[%s98]] %s97
    %vm100 = vcmp.eq.f32.partialorder %v23, 2.0
    %vm101 = vcmp.eq.f32.partialorder %v24, 2.0
    %vm102 = vmand %vm100, %vm38
    %vm103 = vmand %vm101, %vm39
    %s104 = sld [smem:[#allocation2 + $0x2]]
    %v105 = vsel %vm102, 1, 0
    %v106 = vsel %vm103, 1, 0
    %v107 = vadd.s32 %v105, %v106
    %v108 = vand.u32 %v107, 65535
    %v109 = vshrl.u32 %v107, 16
    %v110 = vcvt.s32.f32 %v108
    %v111 = vcvt.s32.f32 %v109
    %112 = vadd.xlane.f32.xlu0 %v110
    %v113 = vpop.xlane.xlu0 %112
    %114 = vadd.xlane.f32.xlu0 %v111
    %v115 = vpop.xlane.xlu0 %114
    %v116 = vcvt.f32.s32 %v113
    %v117 = vcvt.f32.s32 %v115
    %v118 = vshll.u32 %v117, 16
    %v119 = vadd.s32 %v118, %v116
    %v120 = vrot.slane %v119, 4
    %v121 = vadd.s32 %v119, %v120
    %v122 = vrot.slane %v121, 2
    %v123 = vadd.s32 %v121, %v122
    %v124 = vrot.slane %v123, 1
    %v125 = vadd.s32 %v123, %v124
    %s126 = vtos %v125
    %s127 = sadd.s32 %s104, %s126
    %s128 = scalar_lea.smem [#allocation2], 2
    %129 = sst [smem:[%s128]] %s127
    %vm130 = vcmp.eq.f32.partialorder %v23, 3.0
    %vm131 = vcmp.eq.f32.partialorder %v24, 3.0
    %vm132 = vmand %vm130, %vm38
    %vm133 = vmand %vm131, %vm39
    %s134 = sld [smem:[#allocation2 + $0x3]]
    %v135 = vsel %vm132, 1, 0
    %v136 = vsel %vm133, 1, 0
    %v137 = vadd.s32 %v135, %v136
    %v138 = vand.u32 %v137, 65535
    %v139 = vshrl.u32 %v137, 16
    %v140 = vcvt.s32.f32 %v138
    %v141 = vcvt.s32.f32 %v139
    %142 = vadd.xlane.f32.xlu0 %v140
    %v143 = vpop.xlane.xlu0 %142
    %144 = vadd.xlane.f32.xlu0 %v141
    %v145 = vpop.xlane.xlu0 %144
    %v146 = vcvt.f32.s32 %v143
    %v147 = vcvt.f32.s32 %v145
    %v148 = vshll.u32 %v147, 16
    %v149 = vadd.s32 %v148, %v146
    %v150 = vrot.slane %v149, 4
    %v151 = vadd.s32 %v149, %v150
    %v152 = vrot.slane %v151, 2
    %v153 = vadd.s32 %v151, %v152
    %v154 = vrot.slane %v153, 1
    %v155 = vadd.s32 %v153, %v154
    %s156 = vtos %v155
    %s157 = sadd.s32 %s134, %s156
    %s158 = scalar_lea.smem [#allocation2], 3
    %159 = sst [smem:[%s158]] %s157
    %vm160 = vcmp.eq.f32.partialorder %v23, 4.0
    %vm161 = vcmp.eq.f32.partialorder %v24, 4.0
    %vm162 = vmand %vm160, %vm38
    %vm163 = vmand %vm161, %vm39
    %s164 = sld [smem:[#allocation2 + $0x4]]
    %v165 = vsel %vm162, 1, 0
    %v166 = vsel %vm163, 1, 0
    %v167 = vadd.s32 %v165, %v166
    %v168 = vand.u32 %v167, 65535
    %v169 = vshrl.u32 %v167, 16
    %v170 = vcvt.s32.f32 %v168
    %v171 = vcvt.s32.f32 %v169
    %172 = vadd.xlane.f32.xlu0 %v170
    %v173 = vpop.xlane.xlu0 %172
    %174 = vadd.xlane.f32.xlu0 %v171
    %v175 = vpop.xlane.xlu0 %174
    %v176 = vcvt.f32.s32 %v173
    %v177 = vcvt.f32.s32 %v175
    %v178 = vshll.u32 %v177, 16
    %v179 = vadd.s32 %v178, %v176
    %v180 = vrot.slane %v179, 4
    %v181 = vadd.s32 %v179, %v180
    %v182 = vrot.slane %v181, 2
    %v183 = vadd.s32 %v181, %v182
    %v184 = vrot.slane %v183, 1
    %v185 = vadd.s32 %v183, %v184
    %s186 = vtos %v185
    %s187 = sadd.s32 %s164, %s186
    %s188 = scalar_lea.smem [#allocation2], 4
    %189 = sst [smem:[%s188]] %s187
    // Predicated region
    $region10: #{print_layer.1} parent=1 // pred_check
      _
    $region11: #{print_layer.1} parent=1 // pred_check_branch
      %191 = sbr.rel (0) target = $region13
    $region12: #{print_layer.1} parent=1 // pred_region
      %s193 = ssub.s32 16, 16
      %194 = vsyncadd [#allocation3], %s193
      %197 = dma.smem_to_hbm [#allocation2], 16, %s1, [#allocation3]
    $region13: #{print_layer.1} parent=1 // pred_fallthru
      _
    // Predicated region
    $region14: #{print_layer.1} parent=1 // pred_check
      _
    $region15: #{print_layer.1} parent=1 // pred_check_branch
      %199 = sbr.rel (0) target = $region17
    $region16: #{print_layer.1} parent=1 // pred_region
      %200 = dma.done [#allocation3], 16
    $region17: #{print_layer.1} parent=1 // pred_fallthru
      _
    %201 = sfence
    %202 = vsyncpa [#allocation3], 1

</llo_original>
